<compile_context>
chip_gen: v7x
topology: tpu7x:2x2x1
jax: 0.10.0
libtpu: 0.0.40
codegen_flags: <defaults>
</compile_context>

<pallas_src>
import math

import jax
import jax.numpy as jnp
from jax.experimental import pallas as pl
from jax.experimental.pallas import tpu as pltpu


# Per-step output block budget.  Double-buffered by the pipeline (~2x resident);
# with the explicit vmem_limit below this is safe on v5e / v6e / v7x.
_TARGET_BLOCK_BYTES = 8 * 1024 * 1024
# Only force >= 2 grid steps (megacore sharding / pipelining) above this size;
# below it the ~0.35 us per-step overhead dominates any split benefit.
_SPLIT_BYTES = 512 * 1024
# Explicit scoped-VMEM limit: < 64 MiB physical on v7x, well under 128 MiB on
# v5e/v6e, and large enough for 8 MiB double-buffered blocks + temporaries.
_VMEM_LIMIT_BYTES = 48 * 1024 * 1024

# dtypes eligible for the lane-dense fast path (one-hot MXU placement matmul).
_FLAT_DTYPES = (
    jnp.dtype(jnp.float32),
    jnp.dtype(jnp.bfloat16),
    jnp.dtype(jnp.float16),
)
# Cap the flat path so the resident placement matrix stays ~1 MiB and the
# K=N matmul stays negligible next to the HBM writeback (v5e concern); for
# 64 < N < 128 the general path already stores at >= 50% lane utilization.
_FLAT_MAX_N = 64


def _round_up(v: int, m: int) -> int:
    return -(-v // m) * m


def _flat_batch_tile(b: int, row_bytes: int, align: int) -> int:
    """Batch tile for the lane-dense path.

    The batch dim is the sublane dim of both the (TB, N) input block and the
    (TB, N*N) output block, so TB must be a multiple of `align` or equal b.
    """
    tb = max(align, _TARGET_BLOCK_BYTES // max(1, row_bytes))
    if tb >= b:
        # Whole batch fits in one block.  Split in two (aligned) steps when the
        # work is big enough: enables megacore sharding on v7x and gives the
        # pipeline something to overlap.
        if b > align and b * row_bytes > _SPLIT_BYTES:
            half = _round_up(-(-b // 2), align)
            if half < b:
                return half
        return b
    return (tb // align) * align


def _general_batch_tile(b: int, row_bytes: int) -> int:
    """Batch tile for the general path: leading dim, no alignment constraint."""
    tb = max(1, _TARGET_BLOCK_BYTES // max(1, row_bytes))
    if tb >= b:
        if b > 1 and b * row_bytes > _SPLIT_BYTES:
            return -(-b // 2)
        return b
    return min(tb, b)


def _diag_flat_kernel(p_ref, x_ref, o_ref):
    # p_ref: (N, N*N) one-hot placement (constant block, resident across steps)
    # x_ref: (TB, N); o_ref: (TB, N*N) lane-dense flat rows.
    n = x_ref.shape[-1]
    nn = o_ref.shape[-1]
    # y[b, k] = x[b, k // (N+1)] for k = i*(N+1), else 0 — the MXU does the
    # lane placement; accumulation in the output dtype is exact (each output
    # lane is a single x value plus exact zeros).
    y = jnp.dot(x_ref[...], p_ref[...], preferred_element_type=o_ref.dtype)
    # Force off-diagonal lanes to exact zeros (cheap insurance, hidden under
    # the HBM writeback).
    lane = jax.lax.broadcasted_iota(jnp.int32, (1, nn), 1)
    diag_mask = (lane % (n + 1)) == 0
    o_ref[...] = jnp.where(diag_mask, y, jnp.zeros((), o_ref.dtype))


def _diag_block_kernel(x_ref, o_ref):
    # x_ref: (TB, 1, TR) diagonal values for this row block; o_ref: (TB, TR, N).
    # Exact for every bit pattern (pure select, no arithmetic on x).
    j = pl.program_id(1)
    x = x_ref[:, 0, :]                       # (TB, TR)
    tr = x_ref.shape[-1]
    n = o_ref.shape[-1]
    row = jax.lax.broadcasted_iota(jnp.int32, (tr, n), 0) + j * tr
    col = jax.lax.broadcasted_iota(jnp.int32, (tr, n), 1)
    eye = row == col
    o_ref[...] = jnp.where(eye[None, :, :], x[:, :, None],
                           jnp.zeros((), o_ref.dtype))


def batch_diag_matrix(x: jax.Array, *, assume_finite: bool = True) -> jax.Array:
    """Pallas equivalent of torch.diag_embed on the last axis of x.

    assume_finite=True enables the lane-dense MXU fast path for small N; set it
    to False if x may contain inf/NaN that must be preserved exactly (routes to
    the select-based path, which is exact for every bit pattern).
    """
    *lead, n = x.shape
    b = math.prod(lead) if lead else 1
    if b == 0 or n == 0:
        return jnp.zeros((*lead, n, n), dtype=x.dtype)

    x2d = x.reshape(b, n)
    dt = jnp.dtype(x.dtype)
    itemsize = dt.itemsize

    use_flat = (
        assume_finite
        and 2 <= n <= _FLAT_MAX_N
        and dt in _FLAT_DTYPES
    )

    if use_flat:
        # Lane-dense output: write (B, N*N) rows, reshape to (..., N, N) in the
        # wrapper (a free row-major view).  N*N equals the full array dim, so
        # the block's last dim needs no 128-divisibility.
        nn = n * n
        align = 8 * max(1, 4 // itemsize)          # 8 for f32, 16 for bf16/f16
        tb = _flat_batch_tile(b, nn * itemsize, align)

        # Hoisted one-hot placement matrix P[i, k] = 1 iff k == i*(N+1); built
        # once in the wrapper (in the compute dtype) and kept resident via a
        # constant index_map — not rebuilt every grid step.
        rows = jnp.arange(n, dtype=jnp.int32)[:, None]
        cols = jnp.arange(nn, dtype=jnp.int32)[None, :]
        placement = (cols == rows * (n + 1)).astype(x.dtype)

        out2d = pl.pallas_call(
            _diag_flat_kernel,
            out_shape=jax.ShapeDtypeStruct((b, nn), x.dtype),
            grid=(pl.cdiv(b, tb),),
            in_specs=[
                pl.BlockSpec((n, nn), lambda i: (0, 0)),    # placement (resident)
                pl.BlockSpec((tb, n), lambda i: (i, 0)),    # diagonal values
            ],
            out_specs=pl.BlockSpec((tb, nn), lambda i: (i, 0)),
            compiler_params=pltpu.CompilerParams(
                dimension_semantics=("parallel",),
                vmem_limit_bytes=_VMEM_LIMIT_BYTES,
            ),
            cost_estimate=pl.CostEstimate(
                flops=0,                    # placement matmul is incidental
                transcendentals=0,
                bytes_accessed=(b * nn + b * n + n * nn) * itemsize,
            ),
        )(placement, x2d)
        return out2d.reshape(*lead, n, n)

    # General path: exact select-based construction, batch- and (for large N)
    # row-tiled so each output block stays within the VMEM budget.  The input
    # is presented as (B, 1, N) so TB (leading dim) needs no sublane alignment.
    if n * n * itemsize <= _TARGET_BLOCK_BYTES:
        tr = n
    else:
        tr = max(128, (_TARGET_BLOCK_BYTES // (n * itemsize)) // 128 * 128)
        tr = min(tr, n)
    tb = _general_batch_tile(b, tr * n * itemsize)

    x3d = x2d.reshape(b, 1, n)
    out3d = pl.pallas_call(
        _diag_block_kernel,
        out_shape=jax.ShapeDtypeStruct((b, n, n), x.dtype),
        grid=(pl.cdiv(b, tb), pl.cdiv(n, tr)),
        in_specs=[pl.BlockSpec((tb, 1, tr), lambda i, j: (i, 0, j))],
        out_specs=pl.BlockSpec((tb, tr, n), lambda i, j: (i, j, 0)),
        compiler_params=pltpu.CompilerParams(
            dimension_semantics=("parallel", "parallel"),
            vmem_limit_bytes=_VMEM_LIMIT_BYTES,
        ),
        cost_estimate=pl.CostEstimate(
            flops=0,
            transcendentals=0,
            bytes_accessed=(b * n * n + b * n) * itemsize,
        ),
    )(x3d)
    return out3d.reshape(*lead, n, n)


class BatchDiagMatrix:
    """Stateless module: forward(x) = batch_diag_matrix(x)."""

    def __call__(self, x: jax.Array) -> jax.Array:
        return batch_diag_matrix(x)


if __name__ == "__main__":
    key = jax.random.PRNGKey(0)
    k1, k2, k3, k4, k5 = jax.random.split(key, 5)
    module = BatchDiagMatrix()

    def _ref_diag_embed(v):
        n = v.shape[-1]
        idx = jnp.arange(n)
        out = jnp.zeros((*v.shape, n), v.dtype)
        return out.at[..., idx, idx].set(v)

    # Case 1: small shape from the module (batch=2, extra=4, N=16) -> flat path.
    x1 = jax.random.normal(k1, (2, 4, 16), dtype=jnp.float32)
    out1 = jax.block_until_ready(module(x1))
    assert out1.shape == (2, 4, 16, 16) and out1.dtype == x1.dtype
    assert jnp.allclose(out1, _ref_diag_embed(x1)), "flat path (f32) mismatch"

    # Case 2: bf16 through the lane-dense fast path (b=3 not sublane-aligned).
    x2 = jax.random.normal(k2, (3, 16), dtype=jnp.bfloat16)
    out2 = jax.block_until_ready(module(x2))
    assert out2.shape == (3, 16, 16) and out2.dtype == jnp.bfloat16
    assert jnp.allclose(out2, _ref_diag_embed(x2)), "flat path (bf16) mismatch"

    # Case 3: N=24 (not a multiple of 16) now also uses the lane-dense path.
    x3 = jax.random.normal(k3, (3, 24), dtype=jnp.float32)
    out3 = jax.block_until_ready(module(x3))
    assert out3.shape == (3, 24, 24) and out3.dtype == x3.dtype
    assert jnp.allclose(out3, _ref_diag_embed(x3)), "flat path (N=24) mismatch"

    # Case 4: N=72 (> flat cap) -> general (TB, TR, N) path, TB=5 unaligned.
    x4 = jax.random.normal(k4, (5, 72), dtype=jnp.float32)
    out4 = jax.block_until_ready(module(x4))
    assert out4.shape == (5, 72, 72) and out4.dtype == x4.dtype
    assert jnp.allclose(out4, _ref_diag_embed(x4)), "general path mismatch"

    # Case 5: non-finite values preserved exactly via assume_finite=False
    # (select-based path; no 0*inf NaN hazard).
    x5 = jax.random.normal(k5, (2, 16), dtype=jnp.float32)
    x5 = x5.at[0, 3].set(jnp.inf)
    out5 = jax.block_until_ready(batch_diag_matrix(x5, assume_finite=False))
    assert jnp.array_equal(out5, _ref_diag_embed(x5)), "non-finite path mismatch"

    print("KERNEL_OK")
</pallas_src>

<mosaic_0001>
module attributes {stable_mosaic.version = 11 : i64} {
  func.func @_diag_flat_kernel(%arg0: i32, %arg1: memref<16x256xf32, #tpu.memory_space<vmem>>, %arg2: memref<8x16xf32, #tpu.memory_space<vmem>>, %arg3: memref<8x256xf32, #tpu.memory_space<vmem>>) attributes {dimension_semantics = [#tpu.dimension_semantics<parallel>], iteration_bounds = array<i64: 1>, scalar_prefetch = 0 : i64, scratch_operands = 0 : i64, tpu.core_type = #tpu.core_type<tc>, window_params = [{pipeline_mode = #tpu.pipeline_mode<synchronous>, transform_indices = @transform_0, window_bounds = array<i64: 16, 256>}, {transform_indices = @transform_1, window_bounds = array<i64: 8, 16>}, {transform_indices = @transform_2, window_bounds = array<i64: 8, 256>}]} {
    %c0 = arith.constant 0 : index
    %c0_0 = arith.constant 0 : index
    %0 = vector.load %arg2[%c0, %c0_0] : memref<8x16xf32, #tpu.memory_space<vmem>>, vector<8x16xf32>
    %c0_1 = arith.constant 0 : index
    %c0_2 = arith.constant 0 : index
    %1 = vector.load %arg1[%c0_1, %c0_2] : memref<16x256xf32, #tpu.memory_space<vmem>>, vector<16x256xf32>
    %cst = arith.constant dense<0.000000e+00> : vector<8x256xf32>
    %2 = tpu.matmul %0, %1, %cst {dimension_numbers = #tpu.dot_dimension_numbers<[1], [0], [0], [1], [0, 0, 1, 1], [], []>} : vector<8x16xf32>, vector<16x256xf32>, vector<8x256xf32> -> vector<8x256xf32>
    %3 = tpu.iota {dimensions = array<i32: 1>} : vector<1x256xi32>
    %c17_i32 = arith.constant 17 : i32
    %c0_i32 = arith.constant 0 : i32
    %4 = arith.cmpi eq, %c17_i32, %c0_i32 : i32
    %c1_i32 = arith.constant 1 : i32
    %5 = arith.select %4, %c1_i32, %c17_i32 : i32
    %6 = vector.broadcast %5 : i32 to vector<1x256xi32>
    %7 = arith.remsi %3, %6 : vector<1x256xi32>
    %c0_i32_3 = arith.constant 0 : i32
    %8 = vector.broadcast %c0_i32_3 : i32 to vector<1x256xi32>
    %9 = arith.cmpi ne, %7, %8 : vector<1x256xi32>
    %c0_i32_4 = arith.constant 0 : i32
    %10 = vector.broadcast %c0_i32_4 : i32 to vector<1x256xi32>
    %11 = arith.cmpi slt, %7, %10 : vector<1x256xi32>
    %c0_i32_5 = arith.constant 0 : i32
    %12 = arith.cmpi slt, %5, %c0_i32_5 : i32
    %13 = vector.broadcast %12 : i1 to vector<1x256xi1>
    %14 = vector.broadcast %13 : vector<1x256xi1> to vector<1x256xi1>
    %15 = arith.xori %11, %14 : vector<1x256xi1>
    %16 = arith.andi %15, %9 : vector<1x256xi1>
    %17 = vector.broadcast %5 : i32 to vector<1x256xi32>
    %18 = arith.addi %7, %17 : vector<1x256xi32>
    %19 = arith.select %16, %18, %7 : vector<1x256xi1>, vector<1x256xi32>
    %c0_i32_6 = arith.constant 0 : i32
    %20 = vector.broadcast %c0_i32_6 : i32 to vector<1x256xi32>
    %21 = arith.cmpi eq, %19, %20 : vector<1x256xi32>
    %cst_7 = arith.constant 0.000000e+00 : f32
    %22 = vector.shape_cast %21 : vector<1x256xi1> to vector<1x256xi1>
    %23 = vector.broadcast %22 : vector<1x256xi1> to vector<8x256xi1>
    %24 = vector.broadcast %cst_7 : f32 to vector<8x256xf32>
    %25 = arith.select %23, %2, %24 : vector<8x256xi1>, vector<8x256xf32>
    %c0_8 = arith.constant 0 : index
    %c0_9 = arith.constant 0 : index
    %26 = vector.load %arg3[%c0_8, %c0_9] : memref<8x256xf32, #tpu.memory_space<vmem>>, vector<8x256xf32>
    tpu.vector_store %arg3[%c0_8, %c0_9], %25 {strides = array<i32>} : memref<8x256xf32, #tpu.memory_space<vmem>>, vector<8x256xf32>,
    return
  }
  func.func @transform_0(%arg0: i32) -> (i32, i32) {
    %c0_i32 = arith.constant 0 : i32
    %c0_i32_0 = arith.constant 0 : i32
    %c0_i32_1 = arith.constant 0 : i32
    return %c0_i32, %c0_i32_0 : i32, i32
  }
  func.func @transform_1(%arg0: i32) -> (i32, i32) {
    %c0_i32 = arith.constant 0 : i32
    %c0_i32_0 = arith.constant 0 : i32
    return %arg0, %c0_i32 : i32, i32
  }
  func.func @transform_2(%arg0: i32) -> (i32, i32) {
    %c0_i32 = arith.constant 0 : i32
    %c0_i32_0 = arith.constant 0 : i32
    return %arg0, %c0_i32 : i32, i32
  }
}

</mosaic_0001>

<llo_original>
// kernel: tpu_custom_call.1
$region0: #{tpu_custom_call.1}
  #allocation0 [shape = 'u32[]', space=smem, size = 0x4, offset = 0x4, fixed_abs, tag = 'smem constant byte address 0x4 - core index']
  #allocation1 [shape = 'u32[144,128]{1,0:T(1,128)}', space=vmem, size = 0x12000, scoped, tag = 'internal scratch']
  %s0 = inlined_call_operand.hbm [shape: f32[16,256], index: 0, kind: input, shape index: {}]
  %s1 = inlined_call_operand.hbm [shape: f32[8,16], index: 1, kind: input, shape index: {}]
  %s2 = inlined_call_operand.hbm [shape: f32[8,256], index: 2, kind: output, shape index: {}]
  %s3 = sld [smem:[#allocation0]]
  $region26: #{tpu_custom_call.1} parent=0
    _
  %s5 = ssub.s32 1, %s3
  %s6 = scalar_select 0, %s5, %s3
  $region1: #{tpu_custom_call.1} parent=0
    #allocation2 [shape = 'u8[16384]{0}', space=vmem, size = 0x4000, scoped, tag = 'input window, operand 0, single buffered']
    #allocation3 [shape = 's32[1]{0}', space=sflag, size = 0x4, scoped, tag = 'scoped memory for tpu_custom_call.1']
    #allocation4 [shape = 's32[1]{0}', space=sflag, size = 0x4, scoped, tag = 'scoped memory for tpu_custom_call.1']
    #allocation5 [shape = 'u8[4096]{0}', space=vmem, size = 0x1000, scoped, tag = 'input window, operand 1, single buffered']
    #allocation6 [shape = 's32[1]{0}', space=sflag, size = 0x4, scoped, tag = 'scoped memory for tpu_custom_call.1']
    #allocation7 [shape = 'u8[8192]{0}', space=vmem, size = 0x2000, scoped, tag = 'output window, operand 0, single buffered']
    %7 = vsyncpa [#allocation3], 0
    %8 = vsyncpa [#allocation6], 0
    %9 = vsyncpa [#allocation4], 0
    // Predicated region
    $region2: #{tpu_custom_call.1} parent=1 // pred_check
      _
    $region3: #{tpu_custom_call.1} parent=1 // pred_check_branch
      %11 = sbr.rel (0) target = $region5
    $region4: #{tpu_custom_call.1} parent=1 // pred_region
      %s13 = ssub.s32 512, 512
      %14 = vsyncadd [#allocation3], %s13
      %s15 = sshll.u32 [#allocation2], 4
      %s16 = int_to_ptr.vmem [resolvable:$true] %s15
      %21 = dma.hbm_to_vmem [thread:$0]  %s0, 512, %s16, [#allocation3], 256, 256, 16
    $region5: #{tpu_custom_call.1} parent=1 // pred_fallthru
      _
    // Predicated region
    $region6: #{tpu_custom_call.1} parent=1 // pred_check
      _
    $region7: #{tpu_custom_call.1} parent=1 // pred_check_branch
      %23 = sbr.rel (0) target = $region9
    $region8: #{tpu_custom_call.1} parent=1 // pred_region
      %s25 = ssub.s32 128, 128
      %26 = vsyncadd [#allocation6], %s25
      %s28 = sshll.u32 [#allocation5], 4
      %s29 = int_to_ptr.vmem [resolvable:$true] %s28
      %31 = dma.hbm_to_vmem [thread:$0]  %s1, 128, %s29, [#allocation6]
    $region9: #{tpu_custom_call.1} parent=1 // pred_fallthru
      _
    // Predicated region
    $region10: #{tpu_custom_call.1} parent=1 // pred_check
      _
    $region11: #{tpu_custom_call.1} parent=1 // pred_check_branch
      %33 = sbr.rel (0) target = $region13
    $region12: #{tpu_custom_call.1} parent=1 // pred_region
      %34 = dma.done [#allocation3], 512
    $region13: #{tpu_custom_call.1} parent=1 // pred_fallthru
      _
    // Predicated region
    $region14: #{tpu_custom_call.1} parent=1 // pred_check
      _
    $region15: #{tpu_custom_call.1} parent=1 // pred_check_branch
      %36 = sbr.rel (0) target = $region17
    $region16: #{tpu_custom_call.1} parent=1 // pred_region
      %37 = dma.done [#allocation6], 128
    $region17: #{tpu_custom_call.1} parent=1 // pred_fallthru
      _
    %v38 = vld [vmem:[#allocation5] sm:$0xff]
    %v39 = vld [vmem:[#allocation2] sm:$0xff]
    %v40 = vld [vmem:[#allocation2 + $0x8] sm:$0xff]
    %v41 = vld [vmem:[#allocation2 + $0x10] sm:$0xff]
    %v42 = vld [vmem:[#allocation2 + $0x18] sm:$0xff]
    %vm43 = vcmask 130048
    %v45 = vsel %vm43, %v38, 0
    %47 = vmatprep.subr.mxu0 %v40
    %48 = vmatpush1.msra.mxu0 %v39
    %49 = vmatprep.subr.mxu0 %v42
    %50 = vmatpush1.msra.mxu0 %v41
    %51 = vmatprep.subr.mxu0 0.0
    %52 = vmatpush1.msra.mxu0 0.0
    %53 = vmatprep.subr.mxu0 0.0
    %54 = vmatpush1.msra.mxu0 0.0
    %55 = vmatprep.subr.mxu0 0.0
    %56 = vmatpush1.msra.mxu0 0.0
    %57 = vmatprep.subr.mxu0 0.0
    %58 = vmatpush1.msra.mxu0 0.0
    %59 = vmatprep.subr.mxu0 0.0
    %60 = vmatpush1.msra.mxu0 0.0
    %61 = vmatprep.subr.mxu0 0.0
    %62 = vmatpush1.msra.mxu0 0.0
    %63 = vmatprep.subr.mxu0 0.0
    %64 = vmatpush1.msra.mxu0 0.0
    %65 = vmatprep.subr.mxu0 0.0
    %66 = vmatpush1.msra.mxu0 0.0
    %67 = vmatprep.subr.mxu0 0.0
    %68 = vmatpush1.msra.mxu0 0.0
    %69 = vmatprep.subr.mxu0 0.0
    %70 = vmatpush1.msra.mxu0 0.0
    %71 = vmatprep.subr.mxu0 0.0
    %72 = vmatpush1.msra.mxu0 0.0
    %73 = vmatprep.subr.mxu0 0.0
    %74 = vmatpush1.msra.mxu0 0.0
    %75 = vmatprep.subr.mxu0 0.0
    %76 = vmatpush1.msra.mxu0 0.0
    %77 = vmatprep.subr.mxu0 0.0
    %78 = vmatpush1.msra.mxu0 0.0
    %79 = vmatprep.subr.mxu0 0.0
    %80 = vmatpush1.msra.mxu0 0.0
    %81 = vmatprep.subr.mxu0 0.0
    %82 = vmatpush1.msra.mxu0 0.0
    %83 = vmatprep.subr.mxu0 0.0
    %84 = vmatpush1.msra.mxu0 0.0
    %85 = vmatprep.subr.mxu0 0.0
    %86 = vmatpush1.msra.mxu0 0.0
    %87 = vmatprep.subr.mxu0 0.0
    %88 = vmatpush1.msra.mxu0 0.0
    %89 = vmatprep.subr.mxu0 0.0
    %90 = vmatpush1.msra.mxu0 0.0
    %91 = vmatprep.subr.mxu0 0.0
    %92 = vmatpush1.msra.mxu0 0.0
    %93 = vmatprep.subr.mxu0 0.0
    %94 = vmatpush1.msra.mxu0 0.0
    %95 = vmatprep.subr.mxu0 0.0
    %96 = vmatpush1.msra.mxu0 0.0
    %97 = vmatprep.subr.mxu0 0.0
    %98 = vmatpush1.msra.mxu0 0.0
    %99 = vmatprep.subr.mxu0 0.0
    %100 = vmatpush1.msra.mxu0 0.0
    %101 = vmatprep.subr.mxu0 0.0
    %102 = vmatpush1.msra.mxu0 0.0
    %103 = vmatprep.subr.mxu0 0.0
    %104 = vmatpush1.msra.mxu0 0.0
    %105 = vmatprep.subr.mxu0 0.0
    %106 = vmatpush1.msra.mxu0 0.0
    %107 = vmatprep.subr.mxu0 0.0
    %108 = vmatpush1.msra.mxu0 0.0
    %109 = vmatprep.subr.mxu0 0.0
    %110 = vmatpush1.msra.mxu0 0.0
    %111 = vmatprep.mubr.f32.mxu0 0.0
    %112 = vmatmul.mubr.f32.gmra.mrb[0].mxu0 %v45
    %v113 = vpop.f32.mrb[0].mxu0
    %v114 = vadd.f32 0.0, %v113
    %v115 = vpop.f32.mrb[0].mxu0
    %v116 = vadd.f32 0.0, %v115
    %117 = vdwg.mxu0
    %v118 = vlaneseq
    %v119 = vand.u32 %v118, 127
    %v120 = vadd.s32 %v119, 128
    %vm121 = vcmp.lt.s32.totalorder %v119, 0
    %v122 = vsub.s32 0, %v119
    %v123 = vsel %vm121, %v122, %v119
    %v124 = vmul.u32.u64.compose %v123, 4042322161
    %v125 = vextract.low.u32 %v124
    %v126 = vextract.high.u32 %v124
    %v127 = vshrl.u32 %v126, 4
    %v128 = vmul.u32 %v127, 17
    %v129 = vsub.s32 %v123, %v128
    %v130 = vsub.s32 0, %v129
    %v131 = vsel %vm121, %v130, %v129
    %vm132 = vcmp.lt.s32.totalorder %v120, 0
    %v133 = vsub.s32 0, %v120
    %v134 = vsel %vm132, %v133, %v120
    %v135 = vmul.u32.u64.compose %v134, 4042322161
    %v136 = vextract.low.u32 %v135
    %v137 = vextract.high.u32 %v135
    %v138 = vshrl.u32 %v137, 4
    %v139 = vmul.u32 %v138, 17
    %v140 = vsub.s32 %v134, %v139
    %v141 = vsub.s32 0, %v140
    %v142 = vsel %vm132, %v141, %v140
    %vm143 = vcmp.ne.s32.totalorder %v131, 0
    %vm144 = vcmp.ne.s32.totalorder %v142, 0
    %vm145 = vcmp.lt.s32.totalorder %v131, 0
    %vm146 = vcmp.lt.s32.totalorder %v142, 0
    %vm147 = vmand %vm145, %vm143
    %vm148 = vmand %vm146, %vm144
    %v149 = vadd.s32 %v131, 17
    %v150 = vadd.s32 %v142, 17
    %v151 = vsel %vm147, %v149, %v131
    %v152 = vsel %vm148, %v150, %v142
    %vm153 = vcmp.eq.s32.totalorder %v151, 0
    %vm154 = vcmp.eq.s32.totalorder %v152, 0
    %v155 = vsel %vm153, 1, 0
    %v156 = vsel %vm154, 1, 0
    %vm157 = vcmp.eq.s32.totalorder %v155, 1
    %vm158 = vcmp.eq.s32.totalorder %v156, 1
    %v159 = vsel %vm157, %v114, 0.0
    %v160 = vsel %vm158, %v116, 0.0
    %161 = vst [vmem:[#allocation7] sm:$0xff] %v159
    %162 = vst [vmem:[#allocation7 + $0x8] sm:$0xff] %v160
    // Predicated region
    $region18: #{tpu_custom_call.1} parent=1 // pred_check
      _
    $region19: #{tpu_custom_call.1} parent=1 // pred_check_branch
      %164 = sbr.rel (0) target = $region21
    $region20: #{tpu_custom_call.1} parent=1 // pred_region
      %s166 = ssub.s32 256, 256
      %167 = vsyncadd [#allocation4], %s166
      %s169 = sshll.u32 [#allocation7], 4
      %s170 = int_to_ptr.vmem [resolvable:$true] %s169
      %172 = dma.vmem_to_hbm [thread:$0]  %s170, 256, %s2, [#allocation4]
    $region21: #{tpu_custom_call.1} parent=1 // pred_fallthru
      _
    // Predicated region
    $region22: #{tpu_custom_call.1} parent=1 // pred_check
      _
    $region23: #{tpu_custom_call.1} parent=1 // pred_check_branch
      %174 = sbr.rel (0) target = $region25
    $region24: #{tpu_custom_call.1} parent=1 // pred_region
      %175 = dma.done [#allocation4], 256
    $region25: #{tpu_custom_call.1} parent=1 // pred_fallthru
      _
    %176 = vsyncpa [#allocation3], 1
    %177 = vsyncpa [#allocation6], 1
    %178 = vsyncpa [#allocation4], 1

</llo_original>
